<compile_context>
chip_gen: v5e
topology: v5e:2x2
jax: 0.10.0
libtpu: 0.0.40
codegen_flags: <defaults>
</compile_context>

<pallas_src>
import numpy as np
import jax
import jax.numpy as jnp
from jax.experimental import pallas as pl
from jax.experimental.pallas import tpu as pltpu


def _identity_kernel(x_ref, o_ref):
    # Pure pass-through: the empty reference forward performs no arithmetic.
    o_ref[...] = x_ref[...]


def _cdiv(a: int, b: int) -> int:
    return -(-a // b)


def _round_up(n: int, m: int) -> int:
    return _cdiv(n, m) * m


def _round_down(n: int, m: int) -> int:
    return (n // m) * m


def _choose_lane_width(size: int, last: int) -> int:
    """Pick a lane-dense 2-D view width (multiple of 128 when possible)."""
    if last >= 128 and last % 128 == 0:
        return last
    for c in (2048, 1024, 512, 256, 128):
        if size % c == 0:
            return c
    return last  # fallback: original (possibly narrow) last dim


def _vmem_budget_bytes():
    """(total working-set budget, physical/visible VMEM capacity) in bytes."""
    try:
        cap = int(pltpu.get_tpu_info().vmem_capacity_bytes)
    except Exception:
        cap = 64 << 20  # conservative: v7x per-TC VMEM
    # <= 4 live blocks (double-buffered in + out); leave headroom below cap.
    return min(48 << 20, (cap * 3) // 4), cap


def _pallas_identity(x: jax.Array, *, max_block_bytes: int | None = None) -> jax.Array:
    """Tuned Pallas identity copy (only used when explicitly requested)."""
    orig_shape = x.shape
    size = int(x.size)
    itemsize = jnp.dtype(x.dtype).itemsize
    total_bytes = size * itemsize

    last = int(orig_shape[-1])
    lane_w = _choose_lane_width(size, last)
    rows = size // lane_w
    # Order-preserving re-view (free bitcast-style reshape in XLA).
    x2 = x.reshape(rows, lane_w)

    # dtype-aware sublane multiple: 8 for f32, 16 for bf16/f16, 32 for int8/fp8.
    sub = max(8, 32 // max(1, itemsize))

    total_budget, vmem_cap = _vmem_budget_bytes()
    if max_block_bytes is None:
        max_block_bytes = max(4 << 20, total_budget // 4)

    # Bytes of one (lane-padded) row of the 2-D view in VMEM.
    lane_bytes = _round_up(lane_w, 128) * itemsize

    if min(rows, sub) * lane_bytes > max_block_bytes:
        # Lane-axis guard: rows are so wide that even the minimum full-width
        # block would exceed the budget -> tile the lane axis as well.
        tile_r = min(rows, sub)
        tile_c = max(128, _round_down(max_block_bytes // max(1, tile_r * itemsize), 128))
        tile_c = min(tile_c, _round_up(lane_w, 128))
        grid = (_cdiv(rows, tile_r), _cdiv(lane_w, tile_c))
        in_specs = [pl.BlockSpec((tile_r, tile_c), lambda i, j: (i, j))]
        out_specs = pl.BlockSpec((tile_r, tile_c), lambda i, j: (i, j))
        dims = ("parallel", "parallel")
        block_bytes = tile_r * tile_c * itemsize
    else:
        # Row-tiled, full-lane-width blocks (unmasked lane-dense stores).
        cap_rows = max(sub, _round_down(max_block_bytes // lane_bytes, sub))
        tile_r = min(rows, cap_rows)
        if tile_r < rows:
            tile_r = max(sub, _round_down(tile_r, sub))
        # v7x: make sure both TensorCores get work when the array is big
        # enough to care (no effect on single-TC v5e/v6e).
        if tile_r == rows and rows >= 2 * sub and total_bytes >= (2 << 20):
            tile_r = max(sub, _round_down(rows // 2, sub))
        grid = (_cdiv(rows, tile_r),)
        in_specs = [pl.BlockSpec((tile_r, lane_w), lambda i: (i, 0))]
        out_specs = pl.BlockSpec((tile_r, lane_w), lambda i: (i, 0))
        dims = ("parallel",)
        block_bytes = tile_r * lane_bytes

    # Double-buffered in + out working set plus headroom, kept below capacity.
    vmem_limit = int(min(max(vmem_cap - (4 << 20), 32 << 20),
                         max(32 << 20, 4 * block_bytes + (2 << 20))))

    out2 = pl.pallas_call(
        _identity_kernel,
        out_shape=jax.ShapeDtypeStruct((rows, lane_w), x2.dtype),
        grid_spec=pltpu.PrefetchScalarGridSpec(
            num_scalar_prefetch=0,
            grid=grid,
            in_specs=in_specs,
            out_specs=out_specs,
        ),
        compiler_params=pltpu.CompilerParams(
            dimension_semantics=dims,
            vmem_limit_bytes=vmem_limit,
        ),
        cost_estimate=pl.CostEstimate(
            flops=0, transcendentals=0, bytes_accessed=2 * total_bytes),
    )(x2)

    return out2.reshape(orig_shape)


def base_model_forward(x: jax.Array, *, force_pallas_copy: bool = False) -> jax.Array:
    """Pallas equivalent of Base_Model.forward.

    The reference forward is `pass` (no compute).  Default path: return `x`
    untouched — the no-op costs nothing.  Set `force_pallas_copy=True` to run
    the tuned Pallas identity kernel instead (same values, exercises Pallas).
    """
    if not force_pallas_copy:
        return x
    if x.ndim == 0 or x.size == 0:
        return x
    return _pallas_identity(x)


if __name__ == "__main__":
    key = jax.random.PRNGKey(0)
    # Small NCHW input consistent with a generic image-model forward.
    x = jax.random.normal(key, (2, 4, 16, 16), dtype=jnp.float32)
    x_host = np.asarray(x)  # host reference copy

    # Default path: faithful no-op stand-in — returns the input untouched.
    y_fast = base_model_forward(x)
    assert y_fast is x

    # Tuned Pallas identity-copy path (lane-densified to a single (1, 2048)
    # block for this tiny input -> one unmasked full-width store).
    y_kernel = base_model_forward(x, force_pallas_copy=True)
    jax.block_until_ready(y_kernel)
    assert y_kernel.shape == x_host.shape and y_kernel.dtype == x_host.dtype
    assert np.array_equal(np.asarray(y_kernel), x_host)

    # Extra small-shape coverage of the tiling branches:
    # (a) narrow / non-128-multiple last dim -> lane-densify fallback view.
    x2 = jax.random.normal(jax.random.PRNGKey(1), (3, 7, 160), dtype=jnp.float32)
    y2 = _pallas_identity(x2)
    jax.block_until_ready(y2)
    assert np.array_equal(np.asarray(y2), np.asarray(x2))

    # (b) multi-step grid with a ragged final row block (no pad/slice needed).
    x3 = jax.random.normal(jax.random.PRNGKey(2), (100, 256), dtype=jnp.float32)
    y3 = _pallas_identity(x3, max_block_bytes=16 * 1024)
    jax.block_until_ready(y3)
    assert np.array_equal(np.asarray(y3), np.asarray(x3))

    # (c) lane-axis tiling guard: 2-D (sublane, lane) grid for very wide rows.
    x4 = jax.random.normal(jax.random.PRNGKey(3), (16, 1024), dtype=jnp.float32)
    y4 = _pallas_identity(x4, max_block_bytes=2 * 1024)
    jax.block_until_ready(y4)
    assert np.array_equal(np.asarray(y4), np.asarray(x4))

    print("KERNEL_OK")
</pallas_src>

<mosaic_0001>
module attributes {stable_mosaic.version = 11 : i64} {
  func.func @_identity_kernel(%arg0: i32, %arg1: memref<1x2048xf32, #tpu.memory_space<vmem>>, %arg2: memref<1x2048xf32, #tpu.memory_space<vmem>>) attributes {dimension_semantics = [#tpu.dimension_semantics<parallel>], iteration_bounds = array<i64: 1>, scalar_prefetch = 0 : i64, scratch_operands = 0 : i64, tpu.core_type = #tpu.core_type<tc>, window_params = [{transform_indices = @transform_0, window_bounds = array<i64: 1, 2048>}, {transform_indices = @transform_1, window_bounds = array<i64: 1, 2048>}]} {
    %c0 = arith.constant 0 : index
    %c0_0 = arith.constant 0 : index
    %0 = vector.load %arg1[%c0, %c0_0] : memref<1x2048xf32, #tpu.memory_space<vmem>>, vector<1x2048xf32>
    %c0_1 = arith.constant 0 : index
    %c0_2 = arith.constant 0 : index
    %1 = vector.load %arg2[%c0_1, %c0_2] : memref<1x2048xf32, #tpu.memory_space<vmem>>, vector<1x2048xf32>
    tpu.vector_store %arg2[%c0_1, %c0_2], %0 {strides = array<i32>} : memref<1x2048xf32, #tpu.memory_space<vmem>>, vector<1x2048xf32>,
    return
  }
  func.func @transform_0(%arg0: i32) -> (i32, i32) {
    %c0_i32 = arith.constant 0 : i32
    %c0_i32_0 = arith.constant 0 : i32
    return %arg0, %c0_i32 : i32, i32
  }
  func.func @transform_1(%arg0: i32) -> (i32, i32) {
    %c0_i32 = arith.constant 0 : i32
    %c0_i32_0 = arith.constant 0 : i32
    return %arg0, %c0_i32 : i32, i32
  }
}

</mosaic_0001>

<llo_original>
// kernel: tpu_custom_call.1
$region0: #{tpu_custom_call.1}
  #allocation0 [shape = 'u32[]', space=smem, size = 0x4, offset = 0x4, fixed_abs, tag = 'smem constant byte address 0x4 - core index']
  #allocation1 [shape = 'u32[72,128]{1,0:T(1,128)}', space=vmem, size = 0x9000, scoped, tag = 'internal scratch']
  %s0 = inlined_call_operand.hbm [shape: f32[1,2048], index: 0, kind: input, shape index: {}]
  %s1 = inlined_call_operand.hbm [shape: f32[1,2048], index: 1, kind: output, shape index: {}]
  %s2 = sld [smem:[#allocation0]]
  $region18: #{tpu_custom_call.1} parent=0
    _
  %s4 = ssub.s32 1, %s2
  %s5 = scalar_select 0, %s4, %s2
  $region1: #{tpu_custom_call.1} parent=0
    #allocation2 [shape = 'u8[8192]{0}', space=vmem, size = 0x2000, scoped, tag = 'input window, operand 0, single buffered']
    #allocation3 [shape = 's32[1]{0}', space=sflag, size = 0x4, scoped, tag = 'scoped memory for tpu_custom_call.1']
    #allocation4 [shape = 's32[1]{0}', space=sflag, size = 0x4, scoped, tag = 'scoped memory for tpu_custom_call.1']
    #allocation5 [shape = 'u8[8192]{0}', space=vmem, size = 0x2000, scoped, tag = 'output window, operand 0, single buffered']
    %6 = vsyncpa [#allocation3], 0
    %7 = vsyncpa [#allocation4], 0
    // Predicated region
    $region2: #{tpu_custom_call.1} parent=1 // pred_check
      _
    $region3: #{tpu_custom_call.1} parent=1 // pred_check_branch
      %9 = sbr.rel (0) target = $region5
    $region4: #{tpu_custom_call.1} parent=1 // pred_region
      %11 = vsyncadd [#allocation3], 0
      %s13 = sshll.u32 %s0, 4
      %s14 = int_to_ptr.hbm [resolvable:$true] %s13
      %s15 = sshll.u32 [#allocation2], 4
      %s16 = int_to_ptr.vmem [resolvable:$true] %s15
      %18 = dma.hbm_to_vmem [thread:$0]  %s14, 256, %s16, [#allocation3]
    $region5: #{tpu_custom_call.1} parent=1 // pred_fallthru
      _
    // Predicated region
    $region6: #{tpu_custom_call.1} parent=1 // pred_check
      _
    $region7: #{tpu_custom_call.1} parent=1 // pred_check_branch
      %20 = sbr.rel (0) target = $region9
    $region8: #{tpu_custom_call.1} parent=1 // pred_region
      %22 = dma.done [#allocation3], 256
    $region9: #{tpu_custom_call.1} parent=1 // pred_fallthru
      _
    %v23 = vld [vmem:[#allocation2] sm:$0xff]
    %v24 = vld [vmem:[#allocation2 + $0x8] sm:$0xff]
    %25 = vst [vmem:[#allocation5] sm:$0xff] %v23
    %26 = vst [vmem:[#allocation5 + $0x8] sm:$0xff] %v24
    // Predicated region
    $region10: #{tpu_custom_call.1} parent=1 // pred_check
      _
    $region11: #{tpu_custom_call.1} parent=1 // pred_check_branch
      %28 = sbr.rel (0) target = $region13
    $region12: #{tpu_custom_call.1} parent=1 // pred_region
      %30 = vsyncadd [#allocation4], 0
      %s32 = sshll.u32 [#allocation5], 4
      %s33 = int_to_ptr.vmem [resolvable:$true] %s32
      %s34 = sshll.u32 %s1, 4
      %s35 = int_to_ptr.hbm [resolvable:$true] %s34
      %37 = dma.vmem_to_hbm [thread:$0]  %s33, 256, %s35, [#allocation4]
    $region13: #{tpu_custom_call.1} parent=1 // pred_fallthru
      _
    // Predicated region
    $region14: #{tpu_custom_call.1} parent=1 // pred_check
      _
    $region15: #{tpu_custom_call.1} parent=1 // pred_check_branch
      %39 = sbr.rel (0) target = $region17
    $region16: #{tpu_custom_call.1} parent=1 // pred_region
      %41 = dma.done [#allocation4], 256
    $region17: #{tpu_custom_call.1} parent=1 // pred_fallthru
      _
    %42 = vsyncpa [#allocation3], 1
    %43 = vsyncpa [#allocation4], 1

</llo_original>
